<compile_context>
chip_gen: v6e
topology: v6e:2x2x1
jax: 0.10.0
libtpu: 0.0.40
codegen_flags: <defaults>
</compile_context>

<pallas_src>
import jax
import jax.numpy as jnp
from jax.experimental import pallas as pl
from jax.experimental.pallas import tpu as pltpu

_WR, _WG, _WB = 0.299, 0.587, 0.110


def _rgb_to_gray_kernel(x_ref, o_ref):
    # x_ref block: (Bt, 3, ...spatial...)   o_ref block: (Bt, 1, ...spatial...)
    # Slice per channel before casting: keeps live data to one channel at a time
    # (important for bf16/uint8 inputs with large blocks); free for f32 inputs.
    r = x_ref[:, 0].astype(jnp.float32)
    g = x_ref[:, 1].astype(jnp.float32)
    b = x_ref[:, 2].astype(jnp.float32)
    gray = _WR * r + _WG * g + _WB * b
    o_ref[:, 0] = gray.astype(o_ref.dtype)


def _tpu_generation():
    """Best-effort TPU generation (4/5/6/7) from device_kind; None if unknown."""
    try:
        kind = jax.devices()[0].device_kind.lower()
    except Exception:
        return None
    for g in (7, 6, 5, 4):
        if (f"v{g}" in kind) or (f"tpu{g}" in kind):
            return g
    return None


def rgb_to_grayscale(x: jax.Array) -> jax.Array:
    """Convert an RGB image batch (*, 3, H, W) to grayscale (*, 1, H, W)."""
    if x.ndim < 3 or x.shape[-3] != 3:
        raise ValueError(
            "Input size must have a shape of (*, 3, H, W). Got {}".format(x.shape))

    lead = x.shape[:-3]
    H, W = x.shape[-2], x.shape[-1]
    HW = H * W
    xb = x.reshape((-1, 3, HW))  # free reshape for contiguous NCHW
    B = xb.shape[0]

    # Image data is assumed float in (0,1); integer inputs are promoted (extension
    # over torchgeometry, which expects float input).
    out_dtype = x.dtype if jnp.issubdtype(x.dtype, jnp.floating) else jnp.float32
    in_itemsize = jnp.dtype(x.dtype).itemsize
    out_itemsize = jnp.dtype(out_dtype).itemsize

    gen = _tpu_generation()
    params = pltpu.CompilerParams(dimension_semantics=("parallel", "parallel"))
    cost = pl.CostEstimate(
        flops=5 * B * HW,
        transcendentals=0,
        bytes_accessed=B * HW * (3 * in_itemsize + out_itemsize),
    )

    if HW % 128 == 0:
        # Lane/sublane-dense path: spatial -> (rows, 128); fully dense vregs.
        LANES = 128
        r_total = HW // LANES
        # 2048 rows = 4 MiB useful f32 traffic/step (8 MiB double-buffered) -> fits
        # v5e's 16 MiB default scoped VMEM. v6e/v7x (32 MiB default) take 4096 rows
        # (8 MiB useful, 16 MiB double-buffered) for <5% per-step overhead.
        TARGET_ROWS = 4096 if (gen is not None and gen >= 6) else 2048
        if r_total >= TARGET_ROWS:
            rt, bt = TARGET_ROWS, 1
        else:
            rt = r_total
            # Batch several small images per step to amortize the ~0.35us/step cost.
            bt = max(1, min(B, TARGET_ROWS // r_total))

        # v7x: 2 TensorCores per chip -> need >= 2 parallel steps per core, else one
        # TC idles and up to half the HBM bandwidth is forfeited. Shrink bt first
        # (more batch steps), then halve rt while it stays a legal (mult-of-8) block.
        if gen is not None and gen >= 7:
            while pl.cdiv(B, bt) * pl.cdiv(r_total, rt) < 4:
                if bt > 1:
                    bt = (bt + 1) // 2
                elif rt >= 512 and rt % 16 == 0:
                    rt //= 2
                else:
                    break

        xr = xb.reshape((B, 3, r_total, LANES))
        out = pl.pallas_call(
            _rgb_to_gray_kernel,
            out_shape=jax.ShapeDtypeStruct((B, 1, r_total, LANES), out_dtype),
            grid=(pl.cdiv(B, bt), pl.cdiv(r_total, rt)),
            in_specs=[pl.BlockSpec((bt, 3, rt, LANES), lambda b, s: (b, 0, s, 0))],
            out_specs=pl.BlockSpec((bt, 1, rt, LANES), lambda b, s: (b, 0, s, 0)),
            compiler_params=params,
            cost_estimate=cost,
        )(xr)
    else:
        # Ragged fallback: tile the flat spatial axis directly. The 3-/1-channel
        # sublane dims get padded to 8 by the layout, so the per-step element count
        # is capped to keep double-buffered VMEM under the default scoped limit
        # (64K elems -> ~8 MiB on v5e; 128K -> ~16 MiB on v6e/v7x).
        # (A dense-prefix + tiny-tail split would recover full roofline for large
        # non-128-aligned images; kept simple here since such shapes are rare.)
        MAX_ELEMS = (128 * 1024) if (gen is not None and gen >= 6) else (64 * 1024)
        if HW >= MAX_ELEMS:
            t, bt = MAX_ELEMS, 1  # multiple of 128; ragged tail handled by masking
        else:
            t = HW                # full dim (allowed even if not a multiple of 128)
            bt = max(1, min(B, MAX_ELEMS // HW))
        out = pl.pallas_call(
            _rgb_to_gray_kernel,
            out_shape=jax.ShapeDtypeStruct((B, 1, HW), out_dtype),
            grid=(pl.cdiv(B, bt), pl.cdiv(HW, t)),
            in_specs=[pl.BlockSpec((bt, 3, t), lambda b, s: (b, 0, s))],
            out_specs=pl.BlockSpec((bt, 1, t), lambda b, s: (b, 0, s)),
            compiler_params=params,
            cost_estimate=cost,
        )(xb)

    return out.reshape(lead + (1, H, W))


def _reference(x):
    r = x[..., 0:1, :, :].astype(jnp.float32)
    g = x[..., 1:2, :, :].astype(jnp.float32)
    b = x[..., 2:3, :, :].astype(jnp.float32)
    return (_WR * r + _WG * g + _WB * b).astype(x.dtype)


if __name__ == "__main__":
    key = jax.random.PRNGKey(0)
    k1, k2 = jax.random.split(key)

    # Main (lane-dense) path: HW = 256 is a multiple of 128.
    x = jax.random.uniform(k1, (2, 3, 16, 16), dtype=jnp.float32)
    gray = rgb_to_grayscale(x)
    jax.block_until_ready(gray)
    assert gray.shape == (2, 1, 16, 16), gray.shape
    assert jnp.allclose(gray, _reference(x), atol=1e-6), "mismatch (dense path)"

    # Ragged fallback path: HW = 35, no leading batch dim.
    x2 = jax.random.uniform(k2, (3, 5, 7), dtype=jnp.float32)
    gray2 = rgb_to_grayscale(x2)
    jax.block_until_ready(gray2)
    assert gray2.shape == (1, 5, 7), gray2.shape
    assert jnp.allclose(gray2, _reference(x2), atol=1e-6), "mismatch (ragged path)"

    print("KERNEL_OK")
</pallas_src>

<mosaic_0001>
module attributes {stable_mosaic.version = 11 : i64} {
  func.func @_rgb_to_gray_kernel(%arg0: i32, %arg1: i32, %arg2: memref<2x3x2x128xf32, #tpu.memory_space<vmem>>, %arg3: memref<2x1x2x128xf32, #tpu.memory_space<vmem>>) attributes {dimension_semantics = [#tpu.dimension_semantics<parallel>, #tpu.dimension_semantics<parallel>], iteration_bounds = array<i64: 1, 1>, scalar_prefetch = 0 : i64, scratch_operands = 0 : i64, tpu.core_type = #tpu.core_type<tc>, window_params = [{transform_indices = @transform_0, window_bounds = array<i64: 2, 3, 2, 128>}, {transform_indices = @transform_1, window_bounds = array<i64: 2, 1, 2, 128>}]} {
    %c0 = arith.constant 0 : index
    %c0_0 = arith.constant 0 : index
    %c0_1 = arith.constant 0 : index
    %c0_2 = arith.constant 0 : index
    %0 = vector.load %arg2[%c0, %c0_0, %c0_1, %c0_2] : memref<2x3x2x128xf32, #tpu.memory_space<vmem>>, vector<2x1x2x128xf32>
    %1 = vector.shape_cast %0 : vector<2x1x2x128xf32> to vector<2x2x128xf32>
    %c0_3 = arith.constant 0 : index
    %c1 = arith.constant 1 : index
    %c0_4 = arith.constant 0 : index
    %c0_5 = arith.constant 0 : index
    %2 = vector.load %arg2[%c0_3, %c1, %c0_4, %c0_5] : memref<2x3x2x128xf32, #tpu.memory_space<vmem>>, vector<2x1x2x128xf32>
    %3 = vector.shape_cast %2 : vector<2x1x2x128xf32> to vector<2x2x128xf32>
    %c0_6 = arith.constant 0 : index
    %c2 = arith.constant 2 : index
    %c0_7 = arith.constant 0 : index
    %c0_8 = arith.constant 0 : index
    %4 = vector.load %arg2[%c0_6, %c2, %c0_7, %c0_8] : memref<2x3x2x128xf32, #tpu.memory_space<vmem>>, vector<2x1x2x128xf32>
    %5 = vector.shape_cast %4 : vector<2x1x2x128xf32> to vector<2x2x128xf32>
    %cst = arith.constant 2.990000e-01 : f32
    %6 = vector.broadcast %cst : f32 to vector<2x2x128xf32>
    %7 = arith.mulf %6, %1 : vector<2x2x128xf32>
    %cst_9 = arith.constant 5.870000e-01 : f32
    %8 = vector.broadcast %cst_9 : f32 to vector<2x2x128xf32>
    %9 = arith.mulf %8, %3 : vector<2x2x128xf32>
    %10 = arith.addf %7, %9 : vector<2x2x128xf32>
    %cst_10 = arith.constant 1.100000e-01 : f32
    %11 = vector.broadcast %cst_10 : f32 to vector<2x2x128xf32>
    %12 = arith.mulf %11, %5 : vector<2x2x128xf32>
    %13 = arith.addf %10, %12 : vector<2x2x128xf32>
    %c0_11 = arith.constant 0 : index
    %c0_12 = arith.constant 0 : index
    %c0_13 = arith.constant 0 : index
    %c0_14 = arith.constant 0 : index
    %14 = vector.load %arg3[%c0_11, %c0_12, %c0_13, %c0_14] : memref<2x1x2x128xf32, #tpu.memory_space<vmem>>, vector<2x1x2x128xf32>
    %15 = vector.shape_cast %14 : vector<2x1x2x128xf32> to vector<2x2x128xf32>
    %16 = vector.shape_cast %13 : vector<2x2x128xf32> to vector<2x1x2x128xf32>
    tpu.vector_store %arg3[%c0_11, %c0_12, %c0_13, %c0_14], %16 {strides = array<i32>} : memref<2x1x2x128xf32, #tpu.memory_space<vmem>>, vector<2x1x2x128xf32>,
    return
  }
  func.func @transform_0(%arg0: i32, %arg1: i32) -> (i32, i32, i32, i32) {
    %c0_i32 = arith.constant 0 : i32
    %c0_i32_0 = arith.constant 0 : i32
    %c0_i32_1 = arith.constant 0 : i32
    return %arg0, %c0_i32, %arg1, %c0_i32_0 : i32, i32, i32, i32
  }
  func.func @transform_1(%arg0: i32, %arg1: i32) -> (i32, i32, i32, i32) {
    %c0_i32 = arith.constant 0 : i32
    %c0_i32_0 = arith.constant 0 : i32
    %c0_i32_1 = arith.constant 0 : i32
    return %arg0, %c0_i32, %arg1, %c0_i32_0 : i32, i32, i32, i32
  }
}

</mosaic_0001>

<llo_original>
// kernel: tpu_custom_call.1
$region0: #{tpu_custom_call.1}
  #allocation0 [shape = 'u32[]', space=smem, size = 0x4, offset = 0x4, fixed_abs, tag = 'smem constant byte address 0x4 - core index']
  #allocation1 [shape = 'u32[144,128]{1,0:T(1,128)}', space=vmem, size = 0x12000, scoped, tag = 'internal scratch']
  %s0 = inlined_call_operand.hbm [shape: f32[2,3,2,128], index: 0, kind: input, shape index: {}]
  %s1 = inlined_call_operand.hbm [shape: f32[2,1,2,128], index: 1, kind: output, shape index: {}]
  %s2 = sld [smem:[#allocation0]]
  $region18: #{tpu_custom_call.1} parent=0
    _
  %s4 = ssub.s32 1, %s2
  %s5 = scalar_select 0, %s4, %s2
  $region1: #{tpu_custom_call.1} parent=0
    #allocation2 [shape = 'u8[6144]{0}', space=vmem, size = 0x1800, scoped, tag = 'input window, operand 0, single buffered']
    #allocation3 [shape = 's32[1]{0}', space=sflag, size = 0x4, scoped, tag = 'scoped memory for tpu_custom_call.1']
    #allocation4 [shape = 's32[1]{0}', space=sflag, size = 0x4, scoped, tag = 'scoped memory for tpu_custom_call.1']
    #allocation5 [shape = 'u8[2048]{0}', space=vmem, size = 0x800, scoped, tag = 'output window, operand 0, single buffered']
    %6 = vsyncpa [#allocation3], 0
    %7 = vsyncpa [#allocation4], 0
    // Predicated region
    $region2: #{tpu_custom_call.1} parent=1 // pred_check
      _
    $region3: #{tpu_custom_call.1} parent=1 // pred_check_branch
      %9 = sbr.rel (0) target = $region5
    $region4: #{tpu_custom_call.1} parent=1 // pred_region
      %s11 = ssub.s32 192, 192
      %12 = vsyncadd [#allocation3], %s11
      %s13 = sshll.u32 [#allocation2], 4
      %s14 = int_to_ptr.vmem [resolvable:$true] %s13
      %19 = dma.hbm_to_vmem [thread:$0]  %s0, 192, %s14, [#allocation3], 32, 32, 2
    $region5: #{tpu_custom_call.1} parent=1 // pred_fallthru
      _
    // Predicated region
    $region6: #{tpu_custom_call.1} parent=1 // pred_check
      _
    $region7: #{tpu_custom_call.1} parent=1 // pred_check_branch
      %21 = sbr.rel (0) target = $region9
    $region8: #{tpu_custom_call.1} parent=1 // pred_region
      %22 = dma.done [#allocation3], 192
    $region9: #{tpu_custom_call.1} parent=1 // pred_fallthru
      _
    %v23 = vld [vmem:[#allocation2] sm:$0x3]
    %v24 = vld [vmem:[#allocation2 + $0x6] sm:$0x3]
    %s25 = scalar_lea.vmem [#allocation2], 2
    %v26 = vld [vmem:[%s25] sm:$0x3]
    %v27 = vld [vmem:[%s25 + $0x6] sm:$0x3]
    %s28 = scalar_lea.vmem [#allocation2], 4
    %v29 = vld [vmem:[%s28] sm:$0x3]
    %v30 = vld [vmem:[%s28 + $0x6] sm:$0x3]
    %v31 = vmul.f32 %v23, 0.299
    %v32 = vmul.f32 %v24, 0.299
    %v33 = vmul.f32 %v26, 0.587
    %v34 = vmul.f32 %v27, 0.587
    %v35 = vadd.f32 %v31, %v33
    %v36 = vadd.f32 %v32, %v34
    %v37 = vmul.f32 %v29, 0.11
    %v38 = vmul.f32 %v30, 0.11
    %v39 = vadd.f32 %v35, %v37
    %v40 = vadd.f32 %v36, %v38
    %41 = vst [vmem:[#allocation5] sm:$0x3] %v39
    %42 = vst [vmem:[#allocation5 + $0x2] sm:$0x3] %v40
    // Predicated region
    $region10: #{tpu_custom_call.1} parent=1 // pred_check
      _
    $region11: #{tpu_custom_call.1} parent=1 // pred_check_branch
      %44 = sbr.rel (0) target = $region13
    $region12: #{tpu_custom_call.1} parent=1 // pred_region
      %s46 = ssub.s32 64, 64
      %47 = vsyncadd [#allocation4], %s46
      %s48 = sshll.u32 [#allocation5], 4
      %s49 = int_to_ptr.vmem [resolvable:$true] %s48
      %54 = dma.vmem_to_hbm [thread:$0]  %s49, 64, %s1, [#allocation4], 32, 32, 2
    $region13: #{tpu_custom_call.1} parent=1 // pred_fallthru
      _
    // Predicated region
    $region14: #{tpu_custom_call.1} parent=1 // pred_check
      _
    $region15: #{tpu_custom_call.1} parent=1 // pred_check_branch
      %56 = sbr.rel (0) target = $region17
    $region16: #{tpu_custom_call.1} parent=1 // pred_region
      %57 = dma.done [#allocation4], 64
    $region17: #{tpu_custom_call.1} parent=1 // pred_fallthru
      _
    %58 = vsyncpa [#allocation3], 1
    %59 = vsyncpa [#allocation4], 1

</llo_original>
